<compile_context>
chip_gen: v5e
topology: v5e:2x2
jax: 0.10.0
libtpu: 0.0.40
codegen_flags: <defaults>
</compile_context>

<pallas_src>
import functools

import jax
import jax.numpy as jnp
from jax.experimental import pallas as pl
from jax.experimental.pallas import tpu as pltpu


def _ce_ls_kernel(logits_ref, targets_ref, loss_ref, *,
                  epsilon: float, num_classes: int,
                  batch_size: int, block_rows: int):
    blk = pl.program_id(0)

    # Load the (block_rows, K) logits tile; cast happens in-register (no
    # separate materialized f32 copy when logits are bf16).
    x = logits_ref[...].astype(jnp.float32)          # (bB, K)
    t = targets_ref[...]                             # (bB, 1) int32 (lane-padded, tiny)

    bB, K = x.shape

    # Numerically stable shifted logits / log-sum-exp along classes (lanes).
    m = jnp.max(x, axis=1, keepdims=True)            # (bB, 1)
    shifted = x - m                                  # (bB, K)
    lse = jnp.log(jnp.sum(jnp.exp(shifted), axis=1, keepdims=True))  # (bB, 1)

    # Target gather via one masked select + lane reduction (no one-hot tensor).
    class_ids = jax.lax.broadcasted_iota(jnp.int32, (bB, K), 1)
    t_shift = jnp.sum(jnp.where(class_ids == t, shifted, 0.0),
                      axis=1, keepdims=True)         # shifted[b, t_b]   (bB, 1)
    sum_shift = jnp.sum(shifted, axis=1, keepdims=True)                # (bB, 1)

    target_lp = t_shift - lse                        # log_probs[b, t_b]
    row_sum_lp = sum_shift - float(K) * lse          # Σ_k log_probs[b, :]

    # Mask rows of the last partial block that lie beyond the true batch.
    row_ids = blk * block_rows + jax.lax.broadcasted_iota(jnp.int32, (bB, 1), 0)
    valid = row_ids < batch_size
    s1 = jnp.sum(jnp.where(valid, target_lp, 0.0), axis=0, keepdims=True)   # (1, 1)
    s2 = jnp.sum(jnp.where(valid, row_sum_lp, 0.0), axis=0, keepdims=True)  # (1, 1)

    # Per-block partial loss with the TRUE batch size baked in.
    partial = ((-(1.0 - epsilon) / batch_size) * s1
               - (epsilon / (num_classes * batch_size)) * s2)               # (1, 1)

    # Output block is resident across the grid -> use it as the accumulator.
    @pl.when(blk == 0)
    def _():
        loss_ref[...] = jnp.zeros_like(loss_ref)

    loss_ref[...] += partial


def cross_entropy_label_smooth(logits: jax.Array,
                               targets: jax.Array,
                               epsilon: float = 0.1,
                               block_rows: int | None = None) -> jax.Array:
    """Pallas TPU implementation of CrossEntropyLabelSmooth.forward.

    Args:
      logits: (B, K) float array (pre-softmax scores), f32 or bf16.
      targets: (B,) int array of ground-truth class indices.
      epsilon: label-smoothing weight.
      block_rows: optional override of the batch tile size.

    Returns:
      scalar float32 loss.
    """
    B, K = logits.shape
    targets_2d = targets.astype(jnp.int32).reshape(B, 1)

    itemsize = jnp.dtype(logits.dtype).itemsize

    if block_rows is None:
        # Size the batch tile so a double-buffered input stays well inside the
        # default scoped VMEM on every generation (v5e 16 MiB .. v7x 32 MiB):
        # ~6 MiB per buffer -> ~12 MiB double-buffered.
        budget_bytes = 6 * 1024 * 1024
        rows = (budget_bytes // max(1, K * itemsize)) // 8 * 8
        block_rows = int(max(8, min(1024, rows)))
    if B <= block_rows:
        block_rows = B                      # single full-extent block
    block_rows = int(block_rows)
    nblk = pl.cdiv(B, block_rows)

    kernel = functools.partial(_ce_ls_kernel,
                               epsilon=float(epsilon),
                               num_classes=int(K),
                               batch_size=int(B),
                               block_rows=block_rows)

    cost = pl.CostEstimate(flops=5 * B * K,
                           transcendentals=B * K,
                           bytes_accessed=B * K * itemsize + B * 4 + 4)

    out = pl.pallas_call(
        kernel,
        out_shape=jax.ShapeDtypeStruct((1, 1), jnp.float32),
        grid_spec=pltpu.PrefetchScalarGridSpec(
            num_scalar_prefetch=0,
            grid=(nblk,),
            in_specs=[
                pl.BlockSpec((block_rows, K), lambda i: (i, 0)),   # logits tile
                pl.BlockSpec((block_rows, 1), lambda i: (i, 0)),   # targets tile
            ],
            out_specs=pl.BlockSpec((1, 1), lambda i: (0, 0)),      # resident accumulator
        ),
        compiler_params=pltpu.CompilerParams(
            dimension_semantics=("arbitrary",),
            vmem_limit_bytes=32 * 1024 * 1024),
        cost_estimate=cost,
    )(logits, targets_2d)

    return out[0, 0]


def _reference(logits, targets, epsilon=0.1):
    # Pure-JAX reference mirroring the PyTorch module.
    B, K = logits.shape
    log_probs = jax.nn.log_softmax(logits.astype(jnp.float32), axis=1)
    one_hot = jax.nn.one_hot(targets, K, dtype=jnp.float32)
    smooth = (1.0 - epsilon) * one_hot + epsilon / K
    return jnp.sum(jnp.mean(-smooth * log_probs, axis=0))


if __name__ == "__main__":
    key = jax.random.PRNGKey(0)
    k1, k2, k3, k4 = jax.random.split(key, 4)

    epsilon = 0.1

    # Small primary test (shapes implied by the module: (B, K) logits).
    batch, num_classes = 8, 16
    logits = jax.random.normal(k1, (batch, num_classes), dtype=jnp.float32)
    targets = jax.random.randint(k2, (batch,), 0, num_classes, dtype=jnp.int32)

    loss = jax.block_until_ready(cross_entropy_label_smooth(logits, targets, epsilon))
    ref = _reference(logits, targets, epsilon)
    assert jnp.allclose(loss, ref, rtol=1e-5, atol=1e-5), (loss, ref)

    # Multi-block + partial-last-block test (exercises grid, accumulator and
    # row masking): B=20 with forced block_rows=8 -> blocks of 8 / 8 / 4.
    b2, k2c = 20, 160
    logits2 = jax.random.normal(k3, (b2, k2c), dtype=jnp.float32)
    targets2 = jax.random.randint(k4, (b2,), 0, k2c, dtype=jnp.int32)
    loss2 = jax.block_until_ready(
        cross_entropy_label_smooth(logits2, targets2, epsilon, block_rows=8))
    ref2 = _reference(logits2, targets2, epsilon)
    assert jnp.allclose(loss2, ref2, rtol=1e-5, atol=1e-5), (loss2, ref2)

    # bf16 logits path (halved HBM traffic; compute stays f32 inside kernel).
    logits_bf16 = logits2.astype(jnp.bfloat16)
    loss3 = jax.block_until_ready(
        cross_entropy_label_smooth(logits_bf16, targets2, epsilon, block_rows=8))
    ref3 = _reference(logits_bf16, targets2, epsilon)
    assert jnp.allclose(loss3, ref3, rtol=1e-4, atol=1e-4), (loss3, ref3)

    print("KERNEL_OK")
</pallas_src>

<mosaic_0001>
module attributes {stable_mosaic.version = 11 : i64} {
  func.func @_ce_ls_kernel(%arg0: i32, %arg1: memref<8x16xf32, #tpu.memory_space<vmem>>, %arg2: memref<8x1xi32, #tpu.memory_space<vmem>>, %arg3: memref<1x1xf32, #tpu.memory_space<vmem>>) attributes {dimension_semantics = [#tpu.dimension_semantics<arbitrary>], iteration_bounds = array<i64: 1>, scalar_prefetch = 0 : i64, scratch_operands = 0 : i64, tpu.core_type = #tpu.core_type<tc>, window_params = [{transform_indices = @transform_0, window_bounds = array<i64: 8, 16>}, {transform_indices = @transform_1, window_bounds = array<i64: 8, 1>}, {pipeline_mode = #tpu.pipeline_mode<synchronous>, transform_indices = @transform_2, window_bounds = array<i64: 1, 1>}]} {
    %c0 = arith.constant 0 : index
    %c0_0 = arith.constant 0 : index
    %0 = vector.load %arg1[%c0, %c0_0] : memref<8x16xf32, #tpu.memory_space<vmem>>, vector<8x16xf32>
    %c0_1 = arith.constant 0 : index
    %c0_2 = arith.constant 0 : index
    %1 = vector.load %arg2[%c0_1, %c0_2] : memref<8x1xi32, #tpu.memory_space<vmem>>, vector<8x1xi32>
    %cst = arith.constant dense<0xFF800000> : vector<8xf32>
    %2 = vector.multi_reduction <maximumf>, %0, %cst [1] : vector<8x16xf32> to vector<8xf32>
    %3 = vector.shape_cast %2 : vector<8xf32> to vector<8x1xf32>
    %4 = vector.broadcast %3 : vector<8x1xf32> to vector<8x16xf32>
    %5 = arith.subf %0, %4 : vector<8x16xf32>
    %6 = math.exp %5 : vector<8x16xf32>
    %cst_3 = arith.constant dense<0.000000e+00> : vector<8xf32>
    %7 = vector.multi_reduction <add>, %6, %cst_3 [1] : vector<8x16xf32> to vector<8xf32>
    %8 = vector.shape_cast %7 : vector<8xf32> to vector<8x1xf32>
    %9 = math.log %8 : vector<8x1xf32>
    %10 = tpu.iota {dimensions = array<i32: 1>} : vector<8x16xi32>
    %11 = vector.broadcast %1 : vector<8x1xi32> to vector<8x16xi32>
    %12 = arith.cmpi eq, %10, %11 : vector<8x16xi32>
    %cst_4 = arith.constant 0.000000e+00 : f32
    %13 = vector.broadcast %cst_4 : f32 to vector<8x16xf32>
    %14 = arith.select %12, %5, %13 : vector<8x16xi1>, vector<8x16xf32>
    %cst_5 = arith.constant dense<0.000000e+00> : vector<8xf32>
    %15 = vector.multi_reduction <add>, %14, %cst_5 [1] : vector<8x16xf32> to vector<8xf32>
    %16 = vector.shape_cast %15 : vector<8xf32> to vector<8x1xf32>
    %cst_6 = arith.constant dense<0.000000e+00> : vector<8xf32>
    %17 = vector.multi_reduction <add>, %5, %cst_6 [1] : vector<8x16xf32> to vector<8xf32>
    %18 = vector.shape_cast %17 : vector<8xf32> to vector<8x1xf32>
    %19 = arith.subf %16, %9 : vector<8x1xf32>
    %cst_7 = arith.constant 1.600000e+01 : f32
    %20 = vector.broadcast %cst_7 : f32 to vector<8x1xf32>
    %21 = arith.mulf %20, %9 : vector<8x1xf32>
    %22 = arith.subf %18, %21 : vector<8x1xf32>
    %c8_i32 = arith.constant 8 : i32
    %23 = arith.muli %arg0, %c8_i32 : i32
    %24 = tpu.iota {dimensions = array<i32: 0>} : vector<8x1xi32>
    %25 = vector.broadcast %23 : i32 to vector<8x1xi32>
    %26 = arith.addi %25, %24 : vector<8x1xi32>
    %c8_i32_8 = arith.constant 8 : i32
    %27 = vector.broadcast %c8_i32_8 : i32 to vector<8x1xi32>
    %28 = arith.cmpi slt, %26, %27 : vector<8x1xi32>
    %cst_9 = arith.constant 0.000000e+00 : f32
    %29 = vector.broadcast %cst_9 : f32 to vector<8x1xf32>
    %30 = arith.select %28, %19, %29 : vector<8x1xi1>, vector<8x1xf32>
    %cst_10 = arith.constant dense<0.000000e+00> : vector<1xf32>
    %31 = vector.multi_reduction <add>, %30, %cst_10 [0] : vector<8x1xf32> to vector<1xf32>
    %32 = vector.shape_cast %31 : vector<1xf32> to vector<1x1xf32>
    %cst_11 = arith.constant 0.000000e+00 : f32
    %33 = vector.broadcast %cst_11 : f32 to vector<8x1xf32>
    %34 = arith.select %28, %22, %33 : vector<8x1xi1>, vector<8x1xf32>
    %cst_12 = arith.constant dense<0.000000e+00> : vector<1xf32>
    %35 = vector.multi_reduction <add>, %34, %cst_12 [0] : vector<8x1xf32> to vector<1xf32>
    %36 = vector.shape_cast %35 : vector<1xf32> to vector<1x1xf32>
    %cst_13 = arith.constant -1.125000e-01 : f32
    %37 = vector.broadcast %cst_13 : f32 to vector<1x1xf32>
    %38 = arith.mulf %37, %32 : vector<1x1xf32>
    %cst_14 = arith.constant 7.812500e-04 : f32
    %39 = vector.broadcast %cst_14 : f32 to vector<1x1xf32>
    %40 = arith.mulf %39, %36 : vector<1x1xf32>
    %41 = arith.subf %38, %40 : vector<1x1xf32>
    %c0_i32 = arith.constant 0 : i32
    %42 = arith.cmpi eq, %arg0, %c0_i32 : i32
    %43 = arith.extui %42 : i1 to i32
    %c0_i32_15 = arith.constant 0 : i32
    %44 = arith.cmpi ne, %43, %c0_i32_15 : i32
    scf.if %44 {
      %cst_20 = arith.constant 0.000000e+00 : f32
      %48 = vector.broadcast %cst_20 : f32 to vector<1x1xf32>
      %c0_21 = arith.constant 0 : index
      %c0_22 = arith.constant 0 : index
      %49 = vector.load %arg3[%c0_21, %c0_22] : memref<1x1xf32, #tpu.memory_space<vmem>>, vector<1x1xf32>
      tpu.vector_store %arg3[%c0_21, %c0_22], %48 {strides = array<i32>} : memref<1x1xf32, #tpu.memory_space<vmem>>, vector<1x1xf32>,
    } else {
    }
    %c0_16 = arith.constant 0 : index
    %c0_17 = arith.constant 0 : index
    %45 = vector.load %arg3[%c0_16, %c0_17] : memref<1x1xf32, #tpu.memory_space<vmem>>, vector<1x1xf32>
    %46 = arith.addf %45, %41 : vector<1x1xf32>
    %c0_18 = arith.constant 0 : index
    %c0_19 = arith.constant 0 : index
    %47 = vector.load %arg3[%c0_18, %c0_19] : memref<1x1xf32, #tpu.memory_space<vmem>>, vector<1x1xf32>
    tpu.vector_store %arg3[%c0_18, %c0_19], %46 {strides = array<i32>} : memref<1x1xf32, #tpu.memory_space<vmem>>, vector<1x1xf32>,
    return
  }
  func.func @transform_0(%arg0: i32) -> (i32, i32) {
    %c0_i32 = arith.constant 0 : i32
    %c0_i32_0 = arith.constant 0 : i32
    return %arg0, %c0_i32 : i32, i32
  }
  func.func @transform_1(%arg0: i32) -> (i32, i32) {
    %c0_i32 = arith.constant 0 : i32
    %c0_i32_0 = arith.constant 0 : i32
    return %arg0, %c0_i32 : i32, i32
  }
  func.func @transform_2(%arg0: i32) -> (i32, i32) {
    %c0_i32 = arith.constant 0 : i32
    %c0_i32_0 = arith.constant 0 : i32
    %c0_i32_1 = arith.constant 0 : i32
    return %c0_i32, %c0_i32_0 : i32, i32
  }
}

</mosaic_0001>

<llo_original>
// kernel: tpu_custom_call.1
$region0: #{tpu_custom_call.1}
  #allocation0 [shape = 'u32[]', space=smem, size = 0x4, offset = 0x4, fixed_abs, tag = 'smem constant byte address 0x4 - core index']
  #allocation1 [shape = 'u32[72,128]{1,0:T(1,128)}', space=vmem, size = 0x9000, scoped, tag = 'internal scratch']
  %s0 = inlined_call_operand.vmem [shape: f32[8,16], index: 0, kind: input, shape index: {}]
  %s1 = inlined_call_operand.vmem [shape: s32[8,1], index: 1, kind: input, shape index: {}]
  %s2 = inlined_call_operand.hbm [shape: f32[1,1], index: 2, kind: output, shape index: {}]
  %s3 = sld [smem:[#allocation0]]
  $region22: #{tpu_custom_call.1} parent=0
    _
  %s5 = ssub.s32 1, %s3
  %s6 = scalar_select 0, %s5, %s3
  $region1: #{tpu_custom_call.1} parent=0
    #allocation2 [shape = 'u8[512]{0}', space=vmem, size = 0x400, scoped, tag = 'output window, operand 0, single buffered']
    #allocation3 [shape = 's32[1]{0}', space=sflag, size = 0x4, scoped, tag = 'scoped memory for tpu_custom_call.1']
    %7 = vsyncpa [#allocation3], 0
    // Predicated region
    $region2: #{tpu_custom_call.1} parent=1 // pred_check
      _
    $region3: #{tpu_custom_call.1} parent=1 // pred_check_branch
      %9 = sbr.rel (0) target = $region5
    $region4: #{tpu_custom_call.1} parent=1 // pred_region
      _
    $region5: #{tpu_custom_call.1} parent=1 // pred_fallthru
      _
    // Predicated region
    $region6: #{tpu_custom_call.1} parent=1 // pred_check
      _
    $region7: #{tpu_custom_call.1} parent=1 // pred_check_branch
      %11 = sbr.rel (0) target = $region9
    $region8: #{tpu_custom_call.1} parent=1 // pred_region
      _
    $region9: #{tpu_custom_call.1} parent=1 // pred_fallthru
      _
    %v12 = vld [vmem:[%s0] sm:$0xff]
    %v13 = vld [vmem:[%s1] sm:$0xff]
    %vm14 = vcmask 130048
    %v15 = vsel %vm14, %v12, -inf
    %16 = vmax.xlane.f32.xlu0 %v15
    %v17 = vpop.xlane.xlu0 %16
    %v18 = vsub.f32 %v12, %v17
    %v19 = vmul.f32 %v18, 1.442695
    %v20 = vpow.pop %v19
    %v21 = vsel %vm14, %v20, 0.0
    %22 = vadd.xlane.f32.xlu0 %v21
    %v23 = vpop.xlane.xlu0 %22
    %v24 = vlog2.pop %v23
    %v25 = vmul.f32 %v24, 0.6931472
    %v26 = vlaneseq
    %v27 = vand.u32 %v26, 127
    %28 = vset.pattern.permute.xlu0 0
    %29 = vperm.xlu0 %28, %v13
    %v30 = vpop.permute.xlu0 %29
    %vm31 = vcmp.eq.s32.totalorder %v27, %v30
    %v32 = vsel %vm31, %v18, 0.0
    %v33 = vsel %vm14, %v32, 0.0
    %34 = vadd.xlane.f32.xlu0 %v33
    %v35 = vpop.xlane.xlu0 %34
    %v36 = vsel %vm14, %v18, 0.0
    %37 = vadd.xlane.f32.xlu0 %v36
    %v38 = vpop.xlane.xlu0 %37
    %v39 = vsub.f32 %v35, %v25
    %v40 = vmul.f32 %v25, 16.0
    %v41 = vsub.f32 %v38, %v40
    %s42 = smul.u32 0, 8
    %v43 = vlaneseq
    %v44 = vshrl.u32 %v43, 7
    %v45 = vstv %s42
    %v46 = vadd.s32 %v45, %v44
    %vm47 = vcmp.lt.s32.totalorder %v46, 8
    %v48 = vsel %vm47, %v39, 0.0
    %v49 = vrot.slane %v48, 4
    %v50 = vadd.f32 %v48, %v49
    %v51 = vrot.slane %v50, 2
    %v52 = vadd.f32 %v50, %v51
    %v53 = vrot.slane %v52, 1
    %v54 = vadd.f32 %v52, %v53
    %v55 = vsel %vm47, %v41, 0.0
    %v56 = vrot.slane %v55, 4
    %v57 = vadd.f32 %v55, %v56
    %v58 = vrot.slane %v57, 2
    %v59 = vadd.f32 %v57, %v58
    %v60 = vrot.slane %v59, 1
    %v61 = vadd.f32 %v59, %v60
    %v62 = vmul.f32 %v54, -0.1125
    %v63 = vmul.f32 %v61, 0.00078125
    %v64 = vsub.f32 %v62, %v63
    %p65 = scmp.eq.s32.totalorder 0, 0
    // Predicated region
    $region10: #{tpu_custom_call.1} parent=1 // pred_check
      %p66 = pneg %p65
    $region11: #{tpu_custom_call.1} parent=1 // pred_check_branch
      %68 = sbr.rel (%p66) target = $region13
    $region12: #{tpu_custom_call.1} parent=1 // pred_region
      %vm69 = vcmask 0
      %70 = vst.msk [vmem:[#allocation2] sm:$0x1] %vm69, 0.0
    $region13: #{tpu_custom_call.1} parent=1 // pred_fallthru
      _
    %v71 = vld [vmem:[#allocation2] sm:$0x1]
    %v72 = vadd.f32 %v71, %v64
    %vm73 = vcmask 0
    %74 = vst.msk [vmem:[#allocation2] sm:$0x1] %vm73, %v72
    // Predicated region
    $region14: #{tpu_custom_call.1} parent=1 // pred_check
      _
    $region15: #{tpu_custom_call.1} parent=1 // pred_check_branch
      %76 = sbr.rel (0) target = $region17
    $region16: #{tpu_custom_call.1} parent=1 // pred_region
      %78 = vsyncadd [#allocation3], 0
      %s80 = sshll.u32 [#allocation2], 4
      %s81 = int_to_ptr.vmem [resolvable:$true] %s80
      %s82 = sshll.u32 %s2, 4
      %s83 = int_to_ptr.hbm [resolvable:$true] %s82
      %85 = dma.vmem_to_hbm [thread:$0]  %s81, 16, %s83, [#allocation3]
    $region17: #{tpu_custom_call.1} parent=1 // pred_fallthru
      _
    // Predicated region
    $region18: #{tpu_custom_call.1} parent=1 // pred_check
      _
    $region19: #{tpu_custom_call.1} parent=1 // pred_check_branch
      %87 = sbr.rel (0) target = $region21
    $region20: #{tpu_custom_call.1} parent=1 // pred_region
      %89 = dma.done [#allocation3], 16
    $region21: #{tpu_custom_call.1} parent=1 // pred_fallthru
      _
    %90 = vsyncpa [#allocation3], 1

</llo_original>
